<compile_context>
chip_gen: v5e
topology: v5e:2x2
jax: 0.10.0
libtpu: 0.0.40
codegen_flags: <defaults>
</compile_context>

<pallas_src>
import jax
import jax.numpy as jnp
from jax.experimental import pallas as pl
from jax.experimental.pallas import tpu as pltpu


def _round_up(x, m):
    return ((x + m - 1) // m) * m


def receiver_kernel(x_ref, w_ref, b_ref, msg_ref, out_ref):
    # x:   (TB*C, F)  candidate features, flattened in the wrapper (batch tile)
    # w:   (F, H)     linear weight (resident across grid steps)
    # b:   (1, H)     linear bias   (resident)
    # msg: (TB, H)    encoded message (streamed)
    # out: (TB, C)    log-softmax energies over candidates (no lane padding)
    TB, C = out_ref.shape

    # ---- Linear + tanh: ONE flattened 2-D MXU matmul, f32 accumulate --------
    emb = jnp.dot(x_ref[...], w_ref[...],
                  preferred_element_type=jnp.float32)            # (TB*C, H) f32
    emb = jnp.tanh(emb + b_ref[...])                             # f32 tanh (EUP)
    # Small f32 intermediate reshape only (big x tile stays 2-D).
    emb = emb.reshape(TB, C, emb.shape[-1])                      # (TB, C, H)

    # ---- energies[b, c] = <emb[b, c, :], msg[b, :]> --------------------------
    # H is small (e.g. 32): VPU multiply + one cross-lane (XLU) reduction is
    # cheaper than another batched micro-matmul.
    msg = msg_ref[...].astype(jnp.float32)                       # (TB, H)
    energies = jnp.sum(emb * msg[:, None, :], axis=-1)           # (TB, C)

    # ---- log_softmax over candidates (dim=1) ---------------------------------
    m = jnp.max(energies, axis=1, keepdims=True)
    z = energies - m
    lse = jnp.log(jnp.sum(jnp.exp(z), axis=1, keepdims=True))
    out_ref[...] = z - lse                                       # (TB, C) f32


def _vmem_bytes(tb, C, F, H, in_itemsize):
    """Lane/sublane-padding-aware VMEM footprint estimate for one grid step."""
    sub_in = 8 * (4 // in_itemsize)                 # 8 (f32), 16 (bf16), 32 (8b)
    x_tile = _round_up(tb * C, sub_in) * _round_up(F, 128) * in_itemsize
    msg_tile = _round_up(tb, 8) * _round_up(H, 128) * 4
    out_tile = _round_up(tb, 8) * _round_up(C, 128) * 4
    w_res = _round_up(F, sub_in) * _round_up(H, 128) * in_itemsize
    b_res = 8 * _round_up(H, 128) * 4
    emb_scr = _round_up(tb * C, 8) * _round_up(H, 128) * 4       # f32 intermediate
    # Streamed + resident operands are double-buffered by the pipeline.
    return 2 * (x_tile + msg_tile + out_tile + w_res + b_res) + emb_scr


def _choose_batch_tile(B, C, F, H, in_itemsize, vmem_budget,
                       x_tile_target_bytes=4 * 1024 * 1024):
    """Pick batch tile TB and padded batch B_pad (B_pad % TB == 0 or TB == B)."""
    if B < 16:
        # Block equals the full batch dim: legal block shape, no padding.
        return B, B

    def fits(tb):
        return _vmem_bytes(tb, C, F, H, in_itemsize) <= vmem_budget

    # MiB-scale x tiles amortize the ~0.35us/step overhead (29%->85% of HBM
    # roofline in measured BlockSpec sweeps).
    raw_per_row = max(1, C * F * in_itemsize)
    tb = x_tile_target_bytes // raw_per_row
    # Guarantee >= 2 grid steps so the "parallel" batch axis can shard over
    # v7x's 2 TensorCores (neutral on v5e/v6e's single core).
    tb = min(tb, (B + 1) // 2, _round_up(B, 8))
    tb = max(8, (tb // 8) * 8)
    # Shrink to the padding-aware VMEM budget.
    while tb > 8 and not fits(tb):
        tb = max(8, ((tb // 2) // 8) * 8)

    # Prefer a tile that divides B exactly (no wrapper-side jnp.pad of x);
    # otherwise minimize the padded tail.  Bounded downward scan (trace-time).
    best_tb, best_pad = tb, _round_up(B, tb) - B
    lo = max(8, tb - 8 * 4096)
    for d in range(tb, lo - 1, -8):
        pad = _round_up(B, d) - B
        if pad < best_pad:
            best_tb, best_pad = d, pad
            if pad == 0:
                break
    return best_tb, _round_up(B, best_tb)


def receiver_forward(encoded_msg, _input, W, bias, *, matmul_dtype=jnp.bfloat16):
    """Pallas forward for Receiver (image_input=False).

    encoded_msg: (B, H) message encoding
    _input:      (B, C, F) candidate features
    W:           (F, H) linear weight (transposed vs. torch's (H, F))
    bias:        (H,)
    returns:     (B, C) log-softmax energies over candidates (dim=1), float32

    bf16 matmul operands are the default on all generations (v5e's MXU is
    natively bf16); accumulation, tanh and softmax stay in float32.
    """
    B, C, F = _input.shape
    H = W.shape[1]
    in_itemsize = jnp.dtype(matmul_dtype).itemsize

    # VMEM budget: ~75% of the per-core capacity -> ~48 MiB on v7x (64 MiB
    # physical), ~96 MiB on v5e/v6e (128 MiB), leaving compiler headroom.
    try:
        vmem_cap = int(pltpu.get_tpu_info().vmem_capacity_bytes)
    except Exception:
        vmem_cap = 64 * 1024 * 1024
    vmem_budget = int(vmem_cap * 0.75)

    TB, B_pad = _choose_batch_tile(B, C, F, H, in_itemsize, vmem_budget)

    x = _input.astype(matmul_dtype)        # halve the dominant HBM stream
    w = W.astype(matmul_dtype)
    b2d = bias.reshape(1, H).astype(jnp.float32)
    msg = encoded_msg.astype(jnp.float32)

    if B_pad != B:
        # Only taken when no multiple-of-8 tile divides B; the cast was applied
        # first so this single copy is in the narrow dtype.
        x = jnp.pad(x, ((0, B_pad - B), (0, 0), (0, 0)))
        msg = jnp.pad(msg, ((0, B_pad - B), (0, 0)))

    # Free metadata reshape on a contiguous HBM array; keeps the streamed block
    # a trivially (8,128)-legal 2-D tile and avoids in-kernel relayout of x.
    x2d = x.reshape(B_pad * C, F)

    grid = (B_pad // TB,)

    # Advisory cost estimate for XLA's scheduler around the custom call.
    flops = 2 * B_pad * C * F * H + 2 * B_pad * C * H + 5 * B_pad * C
    transcendentals = B_pad * C * H + B_pad * C + B_pad
    bytes_accessed = (x2d.size * in_itemsize + w.size * in_itemsize
                      + msg.size * 4 + b2d.size * 4 + B_pad * C * 4)
    cost = pl.CostEstimate(flops=int(flops), transcendentals=int(transcendentals),
                           bytes_accessed=int(bytes_accessed))

    vmem_limit = int(min(vmem_budget,
                         max(_vmem_bytes(TB, C, F, H, in_itemsize) + 4 * 1024 * 1024,
                             16 * 1024 * 1024)))

    out = pl.pallas_call(
        receiver_kernel,
        out_shape=jax.ShapeDtypeStruct((B_pad, C), jnp.float32),
        grid_spec=pltpu.PrefetchScalarGridSpec(
            num_scalar_prefetch=0,
            grid=grid,
            in_specs=[
                pl.BlockSpec((TB * C, F), lambda i: (i, 0)),   # x: streamed
                pl.BlockSpec((F, H), lambda i: (0, 0)),        # W: resident
                pl.BlockSpec((1, H), lambda i: (0, 0)),        # bias: resident
                pl.BlockSpec((TB, H), lambda i: (i, 0)),       # msg: streamed
            ],
            out_specs=pl.BlockSpec((TB, C), lambda i: (i, 0)),  # lane-unpadded
        ),
        compiler_params=pltpu.CompilerParams(
            dimension_semantics=("parallel",),
            vmem_limit_bytes=vmem_limit,
        ),
        cost_estimate=cost,
    )(x2d, w, b2d, msg)

    return out[:B] if B_pad != B else out


def receiver_reference(encoded_msg, _input, W, bias):
    emb = jnp.tanh(jnp.einsum("bcf,fh->bch", _input, W) + bias[None, None, :])
    energies = jnp.einsum("bch,bh->bc", emb, encoded_msg)
    return jax.nn.log_softmax(energies, axis=1)


if __name__ == "__main__":
    # Small shapes consistent with the module: n_features=16, linear_units=32,
    # batch=2, n_candidates=8.
    B, C, F, H = 2, 8, 16, 32

    key = jax.random.PRNGKey(0)
    k_x, k_msg, k_w, k_b = jax.random.split(key, 4)

    _input = jax.random.normal(k_x, (B, C, F), dtype=jnp.float32)
    encoded_msg = jax.random.normal(k_msg, (B, H), dtype=jnp.float32)
    # Deterministic "Linear(n_features, linear_units)" parameters.
    W = jax.random.normal(k_w, (F, H), dtype=jnp.float32) * (1.0 / jnp.sqrt(F))
    bias = jax.random.normal(k_b, (H,), dtype=jnp.float32) * 0.01

    ref = receiver_reference(encoded_msg, _input, W, bias)

    # Default path: bf16 matmul operands, f32 accumulate / tanh / softmax.
    out = jax.block_until_ready(receiver_forward(encoded_msg, _input, W, bias))
    assert out.shape == (B, C)
    assert jnp.allclose(out, ref, atol=2e-2, rtol=2e-2), "bf16 mismatch vs reference"

    # f32 operand path (tight tolerance).
    out_f32 = jax.block_until_ready(
        receiver_forward(encoded_msg, _input, W, bias, matmul_dtype=jnp.float32))
    assert jnp.allclose(out_f32, ref, atol=1e-5, rtol=1e-5), "f32 mismatch vs reference"

    # Larger batch exercising the tiled/parallel grid path (>= 2 grid steps,
    # divisor-of-B tile, no wrapper padding).
    B2 = 48
    k_x2, k_m2 = jax.random.split(jax.random.PRNGKey(1), 2)
    _input2 = jax.random.normal(k_x2, (B2, C, F), dtype=jnp.float32)
    msg2 = jax.random.normal(k_m2, (B2, H), dtype=jnp.float32)
    ref2 = receiver_reference(msg2, _input2, W, bias)
    out2 = jax.block_until_ready(receiver_forward(msg2, _input2, W, bias))
    assert out2.shape == (B2, C)
    assert jnp.allclose(out2, ref2, atol=2e-2, rtol=2e-2), "tiled bf16 mismatch"

    print("KERNEL_OK")
</pallas_src>

<mosaic_0001>
module attributes {stable_mosaic.version = 11 : i64} {
  func.func @receiver_kernel(%arg0: i32, %arg1: memref<16x16xbf16, #tpu.memory_space<vmem>>, %arg2: memref<16x32xbf16, #tpu.memory_space<vmem>>, %arg3: memref<1x32xf32, #tpu.memory_space<vmem>>, %arg4: memref<2x32xf32, #tpu.memory_space<vmem>>, %arg5: memref<2x8xf32, #tpu.memory_space<vmem>>) attributes {dimension_semantics = [#tpu.dimension_semantics<parallel>], iteration_bounds = array<i64: 1>, scalar_prefetch = 0 : i64, scratch_operands = 0 : i64, tpu.core_type = #tpu.core_type<tc>, window_params = [{transform_indices = @transform_0, window_bounds = array<i64: 16, 16>}, {pipeline_mode = #tpu.pipeline_mode<synchronous>, transform_indices = @transform_1, window_bounds = array<i64: 16, 32>}, {pipeline_mode = #tpu.pipeline_mode<synchronous>, transform_indices = @transform_2, window_bounds = array<i64: 1, 32>}, {transform_indices = @transform_3, window_bounds = array<i64: 2, 32>}, {transform_indices = @transform_4, window_bounds = array<i64: 2, 8>}]} {
    %c0 = arith.constant 0 : index
    %c0_0 = arith.constant 0 : index
    %0 = vector.load %arg1[%c0, %c0_0] : memref<16x16xbf16, #tpu.memory_space<vmem>>, vector<16x16xbf16>
    %c0_1 = arith.constant 0 : index
    %c0_2 = arith.constant 0 : index
    %1 = vector.load %arg2[%c0_1, %c0_2] : memref<16x32xbf16, #tpu.memory_space<vmem>>, vector<16x32xbf16>
    %cst = arith.constant dense<0.000000e+00> : vector<16x32xf32>
    %2 = tpu.matmul %0, %1, %cst {dimension_numbers = #tpu.dot_dimension_numbers<[1], [0], [0], [1], [0, 0, 1, 1], [], []>} : vector<16x16xbf16>, vector<16x32xbf16>, vector<16x32xf32> -> vector<16x32xf32>
    %c0_3 = arith.constant 0 : index
    %c0_4 = arith.constant 0 : index
    %3 = vector.load %arg3[%c0_3, %c0_4] : memref<1x32xf32, #tpu.memory_space<vmem>>, vector<1x32xf32>
    %4 = vector.broadcast %3 : vector<1x32xf32> to vector<16x32xf32>
    %5 = arith.addf %2, %4 : vector<16x32xf32>
    %6 = math.tanh %5 : vector<16x32xf32>
    %7 = vector.shape_cast %6 : vector<16x32xf32> to vector<2x8x32xf32>
    %c0_5 = arith.constant 0 : index
    %c0_6 = arith.constant 0 : index
    %8 = vector.load %arg4[%c0_5, %c0_6] : memref<2x32xf32, #tpu.memory_space<vmem>>, vector<2x32xf32>
    %9 = vector.shape_cast %8 : vector<2x32xf32> to vector<2x1x32xf32>
    %10 = vector.broadcast %9 : vector<2x1x32xf32> to vector<2x8x32xf32>
    %11 = arith.mulf %7, %10 : vector<2x8x32xf32>
    %cst_7 = arith.constant dense<0.000000e+00> : vector<2x8xf32>
    %12 = vector.multi_reduction <add>, %11, %cst_7 [2] : vector<2x8x32xf32> to vector<2x8xf32>
    %cst_8 = arith.constant dense<0xFF800000> : vector<2xf32>
    %13 = vector.multi_reduction <maximumf>, %12, %cst_8 [1] : vector<2x8xf32> to vector<2xf32>
    %14 = vector.shape_cast %13 : vector<2xf32> to vector<2x1xf32>
    %15 = vector.broadcast %14 : vector<2x1xf32> to vector<2x8xf32>
    %16 = arith.subf %12, %15 : vector<2x8xf32>
    %17 = math.exp %16 : vector<2x8xf32>
    %cst_9 = arith.constant dense<0.000000e+00> : vector<2xf32>
    %18 = vector.multi_reduction <add>, %17, %cst_9 [1] : vector<2x8xf32> to vector<2xf32>
    %19 = vector.shape_cast %18 : vector<2xf32> to vector<2x1xf32>
    %20 = math.log %19 : vector<2x1xf32>
    %21 = vector.broadcast %20 : vector<2x1xf32> to vector<2x8xf32>
    %22 = arith.subf %16, %21 : vector<2x8xf32>
    %c0_10 = arith.constant 0 : index
    %c0_11 = arith.constant 0 : index
    %23 = vector.load %arg5[%c0_10, %c0_11] : memref<2x8xf32, #tpu.memory_space<vmem>>, vector<2x8xf32>
    tpu.vector_store %arg5[%c0_10, %c0_11], %22 {strides = array<i32>} : memref<2x8xf32, #tpu.memory_space<vmem>>, vector<2x8xf32>,
    return
  }
  func.func @transform_0(%arg0: i32) -> (i32, i32) {
    %c0_i32 = arith.constant 0 : i32
    %c0_i32_0 = arith.constant 0 : i32
    return %arg0, %c0_i32 : i32, i32
  }
  func.func @transform_1(%arg0: i32) -> (i32, i32) {
    %c0_i32 = arith.constant 0 : i32
    %c0_i32_0 = arith.constant 0 : i32
    %c0_i32_1 = arith.constant 0 : i32
    return %c0_i32, %c0_i32_0 : i32, i32
  }
  func.func @transform_2(%arg0: i32) -> (i32, i32) {
    %c0_i32 = arith.constant 0 : i32
    %c0_i32_0 = arith.constant 0 : i32
    %c0_i32_1 = arith.constant 0 : i32
    return %c0_i32, %c0_i32_0 : i32, i32
  }
  func.func @transform_3(%arg0: i32) -> (i32, i32) {
    %c0_i32 = arith.constant 0 : i32
    %c0_i32_0 = arith.constant 0 : i32
    return %arg0, %c0_i32 : i32, i32
  }
  func.func @transform_4(%arg0: i32) -> (i32, i32) {
    %c0_i32 = arith.constant 0 : i32
    %c0_i32_0 = arith.constant 0 : i32
    return %arg0, %c0_i32 : i32, i32
  }
}

</mosaic_0001>

<llo_original>
// kernel: tpu_custom_call.1
$region0: #{tpu_custom_call.1}
  #allocation0 [shape = 'u32[]', space=smem, size = 0x4, offset = 0x4, fixed_abs, tag = 'smem constant byte address 0x4 - core index']
  #allocation1 [shape = 'u32[72,128]{1,0:T(1,128)}', space=vmem, size = 0x9000, scoped, tag = 'internal scratch']
  %s0 = inlined_call_operand.hbm [shape: bf16[16,16], index: 0, kind: input, shape index: {}]
  %s1 = inlined_call_operand.hbm [shape: bf16[16,32], index: 1, kind: input, shape index: {}]
  %s2 = inlined_call_operand.hbm [shape: f32[1,32], index: 2, kind: input, shape index: {}]
  %s3 = inlined_call_operand.vmem [shape: f32[2,32], index: 3, kind: input, shape index: {}]
  %s4 = inlined_call_operand.hbm [shape: f32[2,8], index: 4, kind: output, shape index: {}]
  %s5 = sld [smem:[#allocation0]]
  $region38: #{tpu_custom_call.1} parent=0
    _
  %s7 = ssub.s32 1, %s5
  %s8 = scalar_select 0, %s7, %s5
  $region1: #{tpu_custom_call.1} parent=0
    #allocation2 [shape = 'u8[4096]{0}', space=vmem, size = 0x1000, scoped, tag = 'input window, operand 0, single buffered']
    #allocation3 [shape = 's32[1]{0}', space=sflag, size = 0x4, scoped, tag = 'scoped memory for tpu_custom_call.1']
    #allocation4 [shape = 's32[1]{0}', space=sflag, size = 0x4, scoped, tag = 'scoped memory for tpu_custom_call.1']
    #allocation5 [shape = 'u8[4096]{0}', space=vmem, size = 0x1000, scoped, tag = 'input window, operand 1, single buffered']
    #allocation6 [shape = 's32[1]{0}', space=sflag, size = 0x4, scoped, tag = 'scoped memory for tpu_custom_call.1']
    #allocation7 [shape = 'u8[512]{0}', space=vmem, size = 0x400, scoped, tag = 'input window, operand 2, single buffered']
    #allocation8 [shape = 'u8[1024]{0}', space=vmem, size = 0x400, scoped, tag = 'output window, operand 0, single buffered']
    %9 = vsyncpa [#allocation3], 0
    %10 = vsyncpa [#allocation6], 0
    %11 = vsyncpa [#allocation4], 0
    // Predicated region
    $region2: #{tpu_custom_call.1} parent=1 // pred_check
      _
    $region3: #{tpu_custom_call.1} parent=1 // pred_check_branch
      %13 = sbr.rel (0) target = $region5
    $region4: #{tpu_custom_call.1} parent=1 // pred_region
      %15 = vsyncadd [#allocation3], 0
      %s16 = sshll.u32 %s0, 4
      %s17 = int_to_ptr.hbm [resolvable:$true] %s16
      %s18 = sshll.u32 [#allocation2], 4
      %s19 = int_to_ptr.vmem [resolvable:$true] %s18
      %24 = dma.hbm_to_vmem [thread:$0]  %s17, 128, %s19, [#allocation3], 64, 64, 4
    $region5: #{tpu_custom_call.1} parent=1 // pred_fallthru
      _
    // Predicated region
    $region6: #{tpu_custom_call.1} parent=1 // pred_check
      _
    $region7: #{tpu_custom_call.1} parent=1 // pred_check_branch
      %26 = sbr.rel (0) target = $region9
    $region8: #{tpu_custom_call.1} parent=1 // pred_region
      %28 = vsyncadd [#allocation6], 0
      %s29 = sshll.u32 %s1, 4
      %s30 = int_to_ptr.hbm [resolvable:$true] %s29
      %s31 = sshll.u32 [#allocation5], 4
      %s32 = int_to_ptr.vmem [resolvable:$true] %s31
      %37 = dma.hbm_to_vmem [thread:$0]  %s30, 128, %s32, [#allocation6], 64, 64, 4
    $region9: #{tpu_custom_call.1} parent=1 // pred_fallthru
      _
    // Predicated region
    $region10: #{tpu_custom_call.1} parent=1 // pred_check
      _
    $region11: #{tpu_custom_call.1} parent=1 // pred_check_branch
      %39 = sbr.rel (0) target = $region13
    $region12: #{tpu_custom_call.1} parent=1 // pred_region
      %41 = vsyncadd [#allocation6], 0
      %s43 = sshll.u32 %s2, 4
      %s44 = int_to_ptr.hbm [resolvable:$true] %s43
      %s45 = sshll.u32 [#allocation7], 4
      %s46 = int_to_ptr.vmem [resolvable:$true] %s45
      %48 = dma.hbm_to_vmem [thread:$0]  %s44, 16, %s46, [#allocation6]
    $region13: #{tpu_custom_call.1} parent=1 // pred_fallthru
      _
    // Predicated region
    $region14: #{tpu_custom_call.1} parent=1 // pred_check
      _
    $region15: #{tpu_custom_call.1} parent=1 // pred_check_branch
      %50 = sbr.rel (0) target = $region17
    $region16: #{tpu_custom_call.1} parent=1 // pred_region
      _
    $region17: #{tpu_custom_call.1} parent=1 // pred_fallthru
      _
    // Predicated region
    $region18: #{tpu_custom_call.1} parent=1 // pred_check
      _
    $region19: #{tpu_custom_call.1} parent=1 // pred_check_branch
      %52 = sbr.rel (0) target = $region21
    $region20: #{tpu_custom_call.1} parent=1 // pred_region
      %54 = dma.done [#allocation3], 128
    $region21: #{tpu_custom_call.1} parent=1 // pred_fallthru
      _
    // Predicated region
    $region22: #{tpu_custom_call.1} parent=1 // pred_check
      _
    $region23: #{tpu_custom_call.1} parent=1 // pred_check_branch
      %56 = sbr.rel (0) target = $region25
    $region24: #{tpu_custom_call.1} parent=1 // pred_region
      %58 = dma.done [#allocation6], 128
    $region25: #{tpu_custom_call.1} parent=1 // pred_fallthru
      _
    // Predicated region
    $region26: #{tpu_custom_call.1} parent=1 // pred_check
      _
    $region27: #{tpu_custom_call.1} parent=1 // pred_check_branch
      %60 = sbr.rel (0) target = $region29
    $region28: #{tpu_custom_call.1} parent=1 // pred_region
      %62 = dma.done [#allocation6], 16
    $region29: #{tpu_custom_call.1} parent=1 // pred_fallthru
      _
    %v64 = vld [vmem:[#allocation2] sm:$0xf]
    %v65 = vld [vmem:[#allocation2 + $0x4] sm:$0xf]
    %v66 = vld [vmem:[#allocation5] sm:$0xf]
    %v67 = vld [vmem:[#allocation5 + $0x4] sm:$0xf]
    %v68 = vld [vmem:[#allocation7] sm:$0x1]
    %v70 = vperm.slane %v68, 0
    %v74 = vunpack.c.l.b16 %v64
    %v75 = vunpack.c.l.b16 %v65
    %v76 = vpack.c.b16 %v75, %v74
    %v79 = vunpack.c.l.b16 %v66
    %v80 = vunpack.c.l.b16 %v67
    %v81 = vpack.c.b16 %v80, %v79
    %vm83 = vcmask 130048
    %v85 = vsel %vm83, %v76, 0
    %87 = vmatpush.bf16.msra.mxu0 0
    %88 = vmatpush.bf16.msra.mxu0 0
    %89 = vmatpush.bf16.msra.mxu0 0
    %90 = vmatpush.bf16.msra.mxu0 0
    %91 = vmatpush.bf16.msra.mxu0 0
    %92 = vmatpush.bf16.msra.mxu0 0
    %93 = vmatpush.bf16.msra.mxu0 0
    %94 = vmatpush.bf16.msra.mxu0 %v81
    %95 = vmatmul.bf16.gmra.mxu0 %v85
    %v96 = vpop.f32.mrf.mxu0
    %v97 = vadd.f32 %v70, %v96
    %v98 = vpop.f32.mrf.mxu0
    %v99 = vadd.f32 %v70, %v98
    %100 = vdwg.mxu0
    %v101 = vtanh.pop %v97
    %v102 = vtanh.pop %v99
    %v103 = vld [vmem:[%s3] sm:$0x3]
    %v105 = vrot.slane %v103, 1
    %v106 = vperm.slane %v103, 0
    %v107 = vperm.slane %v105, 0
    %v110 = vmul.f32 %v101, %v106
    %v111 = vmul.f32 %v102, %v107
    %vm112 = vcmask 261120
    %v113 = vsel %vm112, %v110, 0.0
    %114 = vadd.xlane.f32.xlu0 %v113
    %v115 = vpop.xlane.xlu0 %114
    %v116 = vsel %vm112, %v111, 0.0
    %117 = vadd.xlane.f32.xlu0 %v116
    %v118 = vpop.xlane.xlu0 %117
    %v121 = vlaneseq
    %v122 = vand.u32 %v121, 127
    %v123 = vperm.slane %v115, %v122
    %v124 = vperm.slane %v118, %v122
    %vm125 = vcmask 1041409
    %v126 = vsel %vm125, %v124, %v123
    %vm128 = vcmask 58368
    %v129 = vsel %vm128, %v126, -inf
    %130 = vmax.xlane.f32.xlu0 %v129
    %v131 = vpop.xlane.xlu0 %130
    %v133 = vperm.slane %v131, 0
    %v134 = vperm.slane %v131, 1
    %v137 = vsub.f32 %v115, %v133
    %v138 = vsub.f32 %v118, %v134
    %v139 = vmul.f32 %v137, 1.442695
    %v140 = vpow.pop %v139
    %v141 = vmul.f32 %v138, 1.442695
    %v142 = vpow.pop %v141
    %145 = vset.pattern.permute.xlu0 0
    %146 = vperm.xlu0 %145, %v140
    %v147 = vpop.permute.xlu0 %146
    %148 = vset.pattern.permute.xlu0 0
    %149 = vperm.xlu0 %148, %v142
    %v150 = vpop.permute.xlu0 %149
    %v151 = vperm.slane %v147, %v122
    %v152 = vperm.slane %v150, %v122
    %v153 = vsel %vm125, %v152, %v151
    %v155 = vsel %vm128, %v153, 0.0
    %156 = vadd.xlane.f32.xlu0 %v155
    %v157 = vpop.xlane.xlu0 %156
    %v158 = vlog2.pop %v157
    %v159 = vmul.f32 %v158, 0.6931472
    %v161 = vperm.slane %v159, 0
    %v162 = vperm.slane %v159, 1
    %v165 = vsub.f32 %v137, %v161
    %v166 = vsub.f32 %v138, %v162
    %169 = vset.pattern.permute.xlu0 0
    %170 = vperm.xlu0 %169, %v165
    %v171 = vpop.permute.xlu0 %170
    %172 = vset.pattern.permute.xlu0 0
    %173 = vperm.xlu0 %172, %v166
    %v174 = vpop.permute.xlu0 %173
    %v175 = vperm.slane %v171, %v122
    %v176 = vperm.slane %v174, %v122
    %v177 = vsel %vm125, %v176, %v175
    %179 = vst.msk [vmem:[#allocation8] sm:$0x3] %vm128, %v177
    // Predicated region
    $region30: #{tpu_custom_call.1} parent=1 // pred_check
      _
    $region31: #{tpu_custom_call.1} parent=1 // pred_check_branch
      %181 = sbr.rel (0) target = $region33
    $region32: #{tpu_custom_call.1} parent=1 // pred_region
      %183 = vsyncadd [#allocation4], 0
      %s185 = sshll.u32 [#allocation8], 4
      %s186 = int_to_ptr.vmem [resolvable:$true] %s185
      %s187 = sshll.u32 %s4, 4
      %s188 = int_to_ptr.hbm [resolvable:$true] %s187
      %190 = dma.vmem_to_hbm [thread:$0]  %s186, 32, %s188, [#allocation4]
    $region33: #{tpu_custom_call.1} parent=1 // pred_fallthru
      _
    // Predicated region
    $region34: #{tpu_custom_call.1} parent=1 // pred_check
      _
    $region35: #{tpu_custom_call.1} parent=1 // pred_check_branch
      %192 = sbr.rel (0) target = $region37
    $region36: #{tpu_custom_call.1} parent=1 // pred_region
      %194 = dma.done [#allocation4], 32
    $region37: #{tpu_custom_call.1} parent=1 // pred_fallthru
      _
    %195 = vsyncpa [#allocation3], 1
    %196 = vsyncpa [#allocation6], 1
    %197 = vsyncpa [#allocation4], 1

</llo_original>
